<compile_context>
chip_gen: v6e
topology: v6e:2x2x1
jax: 0.10.0
libtpu: 0.0.40
codegen_flags: <defaults>
</compile_context>

<pallas_src>
from functools import lru_cache, partial

import jax
import jax.numpy as jnp
from jax.experimental import pallas as pl
from jax.experimental.pallas import tpu as pltpu

LANES = 128


@lru_cache(maxsize=1)
def _vmem_budget_bytes():
    """Generation-aware scoped-VMEM cap (~3/4 of physical per-core VMEM)."""
    try:
        phys = int(pltpu.get_tpu_info().vmem_capacity_bytes)
    except Exception:
        phys = 128 << 20  # v5e/v6e physical VMEM
    return int(min((phys * 3) // 4, 96 << 20))


@lru_cache(maxsize=1)
def _native_bf16_compute():
    """True on chips with a bf16 VPU/EUP (v6e / v7x); v5e must compute in f32."""
    try:
        kind = jax.devices()[0].device_kind.lower()
    except Exception:
        return False
    return ("v6" in kind) or ("v7" in kind) or ("tpu7" in kind)


def _swish_kernel(beta_ref, x_ref, o_ref, *, compute_dtype):
    # beta_ref: (1, 1) f32 scalar in SMEM; x_ref / o_ref: VMEM tiles.
    b = beta_ref[0, 0].astype(compute_dtype)
    x = x_ref[...].astype(compute_dtype)
    z = b * x
    if jnp.dtype(compute_dtype) == jnp.dtype(jnp.float32):
        # exp and approx reciprocal both run on the EUP slot -> VALU stays free,
        # keeping the kernel HBM-bound on v7x.  Clamp the exponent so exp never
        # overflows to inf before the approximate reciprocal.
        e = jnp.exp(jnp.minimum(-z, 80.0))
        sig = pl.reciprocal(1.0 + e, approx=True)
    else:
        # Native low-precision path (bf16 VPU/EUP on v6e/v7x): halves vreg
        # pressure and VALU work versus upcasting to f32.
        sig = jax.nn.sigmoid(z)
    o_ref[...] = (x * sig).astype(o_ref.dtype)


@partial(jax.jit, static_argnames=("tile_rows",))
def swish(x, beta, *, tile_rows=None):
    """Swish: x * sigmoid(beta * x).  x: any-shape array; beta: scalar param."""
    orig_shape = x.shape
    dtype = x.dtype
    n = x.size
    itemsize = jnp.dtype(dtype).itemsize
    # Minimum legal sublane multiple for this dtype (f32: 8, bf16: 16, int8: 32).
    sub = 8 * (4 // itemsize)

    if dtype == jnp.bfloat16 and _native_bf16_compute():
        compute_dtype = jnp.bfloat16
    else:
        compute_dtype = jnp.float32

    vmem_cap = _vmem_budget_bytes()
    kernel = partial(_swish_kernel, compute_dtype=compute_dtype)
    beta_arr = jnp.asarray(beta, dtype=jnp.float32).reshape(1, 1)
    cost = pl.CostEstimate(flops=5 * n, transcendentals=2 * n,
                           bytes_accessed=2 * n * itemsize)

    if n % LANES == 0:
        # ---- Common path: lane-dense [rows, 128] view (free bitcast reshape).
        rows = n // LANES
        x2d = x.reshape(rows, LANES)

        max_tile_bytes = max(LANES * itemsize * sub, vmem_cap // 6)
        target_bytes = min(8 << 20, max_tile_bytes)          # ~8 MiB per buffer
        target_rows = max(sub, (target_bytes // (LANES * itemsize)) // sub * sub)

        if tile_rows is None:
            if rows > 2 * target_rows:
                tile_rows = target_rows
            else:
                tile_rows = rows  # single full-extent block
                # Split into 2 steps only when each step still moves >= 512 KiB
                # (below that the extra grid step is pure overhead on 1-TC chips).
                half = -(-rows // 2)
                half = -(-half // sub) * sub
                if half < rows and half * LANES * itemsize >= (512 << 10):
                    tile_rows = half
        else:
            max_rows = max(sub, max_tile_bytes // (LANES * itemsize))
            tile_rows = int(max(1, min(tile_rows, rows, max_rows)))
            if tile_rows < rows:
                tile_rows = min(rows, -(-tile_rows // sub) * sub)

        tile_bytes = tile_rows * LANES * itemsize
        vmem_limit = int(min(vmem_cap, max(32 << 20, 6 * tile_bytes)))
        grid = (pl.cdiv(rows, tile_rows),)

        out = pl.pallas_call(
            kernel,
            out_shape=jax.ShapeDtypeStruct((rows, LANES), dtype),
            grid_spec=pltpu.PrefetchScalarGridSpec(
                num_scalar_prefetch=0,
                grid=grid,
                in_specs=[
                    pl.BlockSpec(memory_space=pltpu.SMEM),               # beta
                    pl.BlockSpec((tile_rows, LANES), lambda i: (i, 0)),  # x tile
                ],
                out_specs=pl.BlockSpec((tile_rows, LANES), lambda i: (i, 0)),
            ),
            compiler_params=pltpu.CompilerParams(
                dimension_semantics=("parallel",),
                vmem_limit_bytes=vmem_limit,
            ),
            cost_estimate=cost,
        )(beta_arr, x2d)
        return out.reshape(orig_shape)

    # ---- Rare path: numel not a multiple of 128.  View as (1, n) and tile the
    # lane dim; the ragged final block is handled by Pallas boundary masking,
    # so there is no pad / slice copy -> still a single HBM read + write pass.
    x2d = x.reshape(1, n)
    blk = LANES * 1024                      # 128K elems per step (lane-aligned)
    if n <= blk:
        blk = n                             # full-extent block is always legal
    grid = (pl.cdiv(n, blk),)
    vmem_limit = int(min(vmem_cap, 40 << 20))

    out = pl.pallas_call(
        kernel,
        out_shape=jax.ShapeDtypeStruct((1, n), dtype),
        grid_spec=pltpu.PrefetchScalarGridSpec(
            num_scalar_prefetch=0,
            grid=grid,
            in_specs=[
                pl.BlockSpec(memory_space=pltpu.SMEM),          # beta
                pl.BlockSpec((1, blk), lambda i: (0, i)),       # x chunk
            ],
            out_specs=pl.BlockSpec((1, blk), lambda i: (0, i)),
        ),
        compiler_params=pltpu.CompilerParams(
            dimension_semantics=("parallel",),
            vmem_limit_bytes=vmem_limit,
        ),
        cost_estimate=cost,
    )(beta_arr, x2d)
    return out.reshape(orig_shape)


if __name__ == "__main__":
    key = jax.random.PRNGKey(0)
    # NCHW input, small shapes (batch=2, channels=4, spatial=16x16).
    x = jax.random.normal(key, (2, 4, 16, 16), dtype=jnp.float32)

    # Parameter init matches nn.Parameter(torch.ones(1)).
    beta = jnp.ones((1,), dtype=jnp.float32)

    y = swish(x, beta)
    jax.block_until_ready(y)

    # Reference check (pure JAX).  Tolerance relaxed vs. exact sigmoid because
    # the kernel uses the EUP approximate reciprocal (~1e-3-level differences).
    y_ref = x * jax.nn.sigmoid(beta[0] * x)
    assert y.shape == x.shape and y.dtype == x.dtype
    max_err = float(jnp.max(jnp.abs(y - y_ref)))
    assert jnp.allclose(y, y_ref, atol=5e-3, rtol=5e-3), max_err

    print("KERNEL_OK")
</pallas_src>

<mosaic_0001>
module attributes {stable_mosaic.version = 11 : i64} {
  func.func @_swish_kernel(%arg0: i32, %arg1: memref<1x1xf32, #tpu.memory_space<smem>>, %arg2: memref<16x128xf32, #tpu.memory_space<vmem>>, %arg3: memref<16x128xf32, #tpu.memory_space<vmem>>) attributes {dimension_semantics = [#tpu.dimension_semantics<parallel>], iteration_bounds = array<i64: 1>, scalar_prefetch = 0 : i64, scratch_operands = 0 : i64, tpu.core_type = #tpu.core_type<tc>, window_params = [{transform_indices = @transform_0, window_bounds = array<i64: 1, 1>}, {transform_indices = @transform_1, window_bounds = array<i64: 16, 128>}, {transform_indices = @transform_2, window_bounds = array<i64: 16, 128>}]} {
    %c0 = arith.constant 0 : index
    %c0_0 = arith.constant 0 : index
    %0 = memref.load %arg1[%c0, %c0_0] : memref<1x1xf32, #tpu.memory_space<smem>>
    %c0_1 = arith.constant 0 : index
    %c0_2 = arith.constant 0 : index
    %1 = vector.load %arg2[%c0_1, %c0_2] : memref<16x128xf32, #tpu.memory_space<vmem>>, vector<16x128xf32>
    %2 = vector.broadcast %0 : f32 to vector<16x128xf32>
    %3 = arith.mulf %2, %1 : vector<16x128xf32>
    %cst = arith.constant 0.000000e+00 : f32
    %4 = vector.broadcast %cst : f32 to vector<16x128xf32>
    %5 = arith.subf %4, %3 : vector<16x128xf32>
    %cst_3 = arith.constant 8.000000e+01 : f32
    %6 = vector.broadcast %cst_3 : f32 to vector<16x128xf32>
    %7 = arith.minimumf %5, %6 : vector<16x128xf32>
    %8 = math.exp %7 : vector<16x128xf32>
    %cst_4 = arith.constant 1.000000e+00 : f32
    %9 = vector.broadcast %cst_4 : f32 to vector<16x128xf32>
    %10 = arith.addf %9, %8 : vector<16x128xf32>
    %11 = tpu.reciprocal %10 {approx = true} : vector<16x128xf32> -> vector<16x128xf32>
    %12 = arith.mulf %1, %11 : vector<16x128xf32>
    %c0_5 = arith.constant 0 : index
    %c0_6 = arith.constant 0 : index
    %13 = vector.load %arg3[%c0_5, %c0_6] : memref<16x128xf32, #tpu.memory_space<vmem>>, vector<16x128xf32>
    tpu.vector_store %arg3[%c0_5, %c0_6], %12 {strides = array<i32>} : memref<16x128xf32, #tpu.memory_space<vmem>>, vector<16x128xf32>,
    return
  }
  func.func @transform_0(%arg0: i32) -> (i32, i32) {
    %c0_i32 = arith.constant 0 : i32
    %c0_i32_0 = arith.constant 0 : i32
    %c0_i32_1 = arith.constant 0 : i32
    return %c0_i32, %c0_i32_0 : i32, i32
  }
  func.func @transform_1(%arg0: i32) -> (i32, i32) {
    %c0_i32 = arith.constant 0 : i32
    %c0_i32_0 = arith.constant 0 : i32
    return %arg0, %c0_i32 : i32, i32
  }
  func.func @transform_2(%arg0: i32) -> (i32, i32) {
    %c0_i32 = arith.constant 0 : i32
    %c0_i32_0 = arith.constant 0 : i32
    return %arg0, %c0_i32 : i32, i32
  }
}

</mosaic_0001>

<llo_original>
// kernel: swish.1
$region0: #{swish.1}
  #allocation0 [shape = 'u32[]', space=smem, size = 0x4, offset = 0x4, fixed_abs, tag = 'smem constant byte address 0x4 - core index']
  #allocation1 [shape = 'u32[144,128]{1,0:T(1,128)}', space=vmem, size = 0x12000, scoped, tag = 'internal scratch']
  #allocation2 [shape = 'f32[1,1]{1,0:T(1,128)S(6)}', space=smem, size = 0x200, scoped, tag = 'scoped memory for swish.1']
  %s0 = inlined_call_operand.<no memory space> [shape: f32[1,1], index: 0, kind: input, shape index: {}]
  %s1 = inlined_call_operand.vmem [shape: f32[16,128], index: 1, kind: input, shape index: {}]
  %s2 = inlined_call_operand.vmem [shape: f32[16,128], index: 2, kind: output, shape index: {}]
  %s3 = sld [smem:[#allocation0]]
  $region18: #{swish.1} parent=0
    _
  %s5 = ssub.s32 1, %s3
  %s6 = scalar_select 0, %s5, %s3
  %7 = sst [smem:[#allocation2]] %s0
  // Predicated region
  $region2: #{swish.1} parent=0 // pred_check
    _
  $region3: #{swish.1} parent=0 // pred_check_branch
    %9 = sbr.rel (0) target = $region5
  $region4: #{swish.1} parent=0 // pred_region
    _
  $region5: #{swish.1} parent=0 // pred_fallthru
    _
  // Predicated region
  $region6: #{swish.1} parent=0 // pred_check
    _
  $region7: #{swish.1} parent=0 // pred_check_branch
    %11 = sbr.rel (0) target = $region9
  $region8: #{swish.1} parent=0 // pred_region
    _
  $region9: #{swish.1} parent=0 // pred_fallthru
    _
  %s12 = sld [smem:[#allocation2]]
  %v13 = vld [vmem:[%s1] sm:$0xff]
  %v14 = vld [vmem:[%s1 + $0x8] sm:$0xff]
  %v15 = vstv %s12
  %v16 = vmul.f32 %v15, %v13
  %v17 = vmul.f32 %v15, %v14
  %v18 = vsub.f32 0.0, %v16
  %v19 = vsub.f32 0.0, %v17
  %v20 = vmin.f32 %v18, 80.0
  %v21 = vmin.f32 %v19, 80.0
  %v22 = vmul.f32 %v20, 1.442695
  %v23 = vpow.pop %v22
  %v24 = vmul.f32 %v21, 1.442695
  %v25 = vpow.pop %v24
  %v26 = vadd.f32 %v23, 1.0
  %v27 = vadd.f32 %v25, 1.0
  %v28 = vrcp.pop %v26
  %v29 = vrcp.pop %v27
  %v30 = vmul.f32 %v13, %v28
  %v31 = vmul.f32 %v14, %v29
  %32 = vst [vmem:[%s2] sm:$0xff] %v30
  %33 = vst [vmem:[%s2 + $0x8] sm:$0xff] %v31
  // Predicated region
  $region10: #{swish.1} parent=0 // pred_check
    _
  $region11: #{swish.1} parent=0 // pred_check_branch
    %35 = sbr.rel (0) target = $region13
  $region12: #{swish.1} parent=0 // pred_region
    _
  $region13: #{swish.1} parent=0 // pred_fallthru
    _
  // Predicated region
  $region14: #{swish.1} parent=0 // pred_check
    _
  $region15: #{swish.1} parent=0 // pred_check_branch
    %37 = sbr.rel (0) target = $region17
  $region16: #{swish.1} parent=0 // pred_region
    _
  $region17: #{swish.1} parent=0 // pred_fallthru
    _

</llo_original>
